<compile_context>
chip_gen: v5e
topology: v5e:2x2
jax: 0.10.0
libtpu: 0.0.40
codegen_flags: <defaults>
</compile_context>

<pallas_src>
import numpy as np
import jax
import jax.numpy as jnp
from jax.experimental import pallas as pl
from jax.experimental.pallas import tpu as pltpu

C_IN, C_OUT, K = 3, 16, 7
H, W = 16, 16
PAD = 3
FEAT = C_IN * K * K          # 147 im2col features
FEAT_PAD = 160               # padded contraction depth (multiple of 16 for bf16 sublanes)
HW_HALF = H * (W // 2)       # 128 pooled spatial columns

# channel permutation: even output channels first, odd second, so the pool's
# channel-pair max becomes a max of two contiguous 8-row slabs in the kernel.
_CH_PERM = tuple(range(0, C_OUT, 2)) + tuple(range(1, C_OUT, 2))


def conv_relu_pool_kernel(w_ref, p_ref, b_ref, o_ref):
    # w_ref: (16, 160) bf16   permuted out-channels x [147 feats | zero pad]
    # p_ref: (2, 160, 128) bf16  [width parity, feats, h*8 + j] patch matrix
    # b_ref: (16, 1) f32      permuted (bias - 0.5)
    # o_ref: (8, 128) f32     pooled output (single lane-dense vreg)
    w = w_ref[...]
    z_even = jnp.dot(w, p_ref[0], preferred_element_type=jnp.float32)  # (16,128) f32
    z_odd = jnp.dot(w, p_ref[1], preferred_element_type=jnp.float32)   # (16,128) f32
    m = jnp.maximum(z_even, z_odd) + b_ref[...]   # width-pair max, then bias-0.5 per channel
    m = jnp.maximum(m, 0.0)                       # ReLU
    o_ref[...] = jnp.maximum(m[0:8, :], m[8:16, :])   # channel-pair max -> (8,128)


def prepare_params(weight, bias):
    """One-time parameter / constant packing (hoisted out of the per-call forward)."""
    perm = jnp.array(_CH_PERM, dtype=jnp.int32)
    w2 = weight.reshape(C_OUT, FEAT)[perm]                           # (16, 147)
    w_packed = jnp.pad(w2, ((0, 0), (0, FEAT_PAD - FEAT))).astype(jnp.bfloat16)  # (16,160)
    bias_col = (bias[perm] - 0.5).reshape(C_OUT, 1).astype(jnp.float32)          # (16,1)

    # Parity-split identity filter: one stride-(1,2) conv produces, for each width
    # parity p (w = 2j + p), the im2col row (ci,kh,kw) at output column (h, j).
    filt = np.zeros((2 * FEAT_PAD, C_IN, K, K + 1), np.float32)
    for par in range(2):
        for ci in range(C_IN):
            for kh in range(K):
                for kw in range(K):
                    f = ci * K * K + kh * K + kw
                    filt[par * FEAT_PAD + f, ci, kh, kw + par] = 1.0
    eye_filt = jnp.asarray(filt, dtype=jnp.bfloat16)                  # (320, 3, 7, 8)
    return w_packed, bias_col, eye_filt


@jax.jit
def model_forward(x, w_packed, bias_col, eye_filt):
    # x: (1, 3, 16, 16) NCHW f32; other args from prepare_params.
    # im2col via ONE bf16 identity-kernel conv (DEFAULT precision: 0/1 filter keeps
    # values exactly bf16(x)); stride (1,2) + 8-wide filter emits both width parities
    # as separate feature blocks, so no transpose/concat/cast glue is needed.
    xb = x.astype(jnp.bfloat16)
    patches = jax.lax.conv_general_dilated(
        xb, eye_filt, window_strides=(1, 2),
        padding=((PAD, PAD), (PAD, PAD + 1)),
        dimension_numbers=("NCHW", "OIHW", "NCHW"))                   # (1, 320, 16, 8) bf16
    p = patches.reshape(2, FEAT_PAD, HW_HALF)                         # contiguous -> (2,160,128)

    cost = pl.CostEstimate(
        flops=2 * 2 * C_OUT * FEAT_PAD * HW_HALF,
        transcendentals=0,
        bytes_accessed=(C_OUT * FEAT_PAD * 2 + 2 * FEAT_PAD * HW_HALF * 2
                        + C_OUT * 4 + 8 * 128 * 4))

    out = pl.pallas_call(
        conv_relu_pool_kernel,
        out_shape=jax.ShapeDtypeStruct((8, 128), jnp.float32),
        in_specs=[pl.BlockSpec(memory_space=pltpu.MemorySpace.VMEM)] * 3,
        out_specs=pl.BlockSpec(memory_space=pltpu.MemorySpace.VMEM),
        cost_estimate=cost,
    )(w_packed, p, bias_col)
    return out                                                        # (8, 128)


def reference(x, weight, bias):
    v1 = jax.lax.conv_general_dilated(
        x, weight, window_strides=(1, 1), padding=((PAD, PAD), (PAD, PAD)),
        dimension_numbers=("NCHW", "OIHW", "NCHW"),
        precision=jax.lax.Precision.HIGHEST) + bias.reshape(1, -1, 1, 1)
    v3 = jnp.maximum(v1 - 0.5, 0.0)
    v4 = v3.reshape(1, C_OUT, H * W)
    # F.max_pool2d(kernel_size=2) on 3-D input treats v4 as (C=1, H=16, W=256)
    v5 = v4.reshape(1, C_OUT // 2, 2, (H * W) // 2, 2).max(axis=(2, 4))
    return v5[0]                                                      # squeeze dim 0 -> (8, 128)


if __name__ == "__main__":
    key = jax.random.PRNGKey(0)
    kx, kw, kb = jax.random.split(key, 3)
    x = jax.random.normal(kx, (1, C_IN, H, W), dtype=jnp.float32)
    bound = 1.0 / (FEAT ** 0.5)       # PyTorch Conv2d default init bound
    weight = jax.random.uniform(kw, (C_OUT, C_IN, K, K), jnp.float32, -bound, bound)
    bias = jax.random.uniform(kb, (C_OUT,), jnp.float32, -bound, bound)

    w_packed, bias_col, eye_filt = jax.block_until_ready(prepare_params(weight, bias))
    out = jax.block_until_ready(model_forward(x, w_packed, bias_col, eye_filt))
    ref = reference(x, weight, bias)
    assert out.shape == (8, 128), out.shape
    assert jnp.allclose(out, ref, atol=2e-2, rtol=2e-2), \
        float(jnp.max(jnp.abs(out - ref)))
    print("KERNEL_OK")
</pallas_src>

<mosaic_0001>
module attributes {stable_mosaic.version = 11 : i64} {
  func.func @conv_relu_pool_kernel(%arg0: memref<16x160xbf16, #tpu.memory_space<vmem>>, %arg1: memref<2x160x128xbf16, #tpu.memory_space<vmem>>, %arg2: memref<16x1xf32, #tpu.memory_space<vmem>>, %arg3: memref<8x128xf32, #tpu.memory_space<vmem>>) attributes {dimension_semantics = [], scalar_prefetch = 0 : i64, scratch_operands = 0 : i64, tpu.core_type = #tpu.core_type<tc>} {
    %c0 = arith.constant 0 : index
    %c0_0 = arith.constant 0 : index
    %0 = vector.load %arg0[%c0, %c0_0] : memref<16x160xbf16, #tpu.memory_space<vmem>>, vector<16x160xbf16>
    %c0_1 = arith.constant 0 : index
    %c0_2 = arith.constant 0 : index
    %c0_3 = arith.constant 0 : index
    %1 = vector.load %arg1[%c0_1, %c0_2, %c0_3] : memref<2x160x128xbf16, #tpu.memory_space<vmem>>, vector<1x160x128xbf16>
    %2 = vector.shape_cast %1 : vector<1x160x128xbf16> to vector<160x128xbf16>
    %cst = arith.constant dense<0.000000e+00> : vector<16x128xf32>
    %3 = tpu.matmul %0, %2, %cst {dimension_numbers = #tpu.dot_dimension_numbers<[1], [0], [0], [1], [0, 0, 1, 1], [], []>} : vector<16x160xbf16>, vector<160x128xbf16>, vector<16x128xf32> -> vector<16x128xf32>
    %c1 = arith.constant 1 : index
    %c0_4 = arith.constant 0 : index
    %c0_5 = arith.constant 0 : index
    %4 = vector.load %arg1[%c1, %c0_4, %c0_5] : memref<2x160x128xbf16, #tpu.memory_space<vmem>>, vector<1x160x128xbf16>
    %5 = vector.shape_cast %4 : vector<1x160x128xbf16> to vector<160x128xbf16>
    %cst_6 = arith.constant dense<0.000000e+00> : vector<16x128xf32>
    %6 = tpu.matmul %0, %5, %cst_6 {dimension_numbers = #tpu.dot_dimension_numbers<[1], [0], [0], [1], [0, 0, 1, 1], [], []>} : vector<16x160xbf16>, vector<160x128xbf16>, vector<16x128xf32> -> vector<16x128xf32>
    %7 = arith.maximumf %3, %6 : vector<16x128xf32>
    %c0_7 = arith.constant 0 : index
    %c0_8 = arith.constant 0 : index
    %8 = vector.load %arg2[%c0_7, %c0_8] : memref<16x1xf32, #tpu.memory_space<vmem>>, vector<16x1xf32>
    %9 = vector.broadcast %8 : vector<16x1xf32> to vector<16x128xf32>
    %10 = arith.addf %7, %9 : vector<16x128xf32>
    %cst_9 = arith.constant 0.000000e+00 : f32
    %11 = vector.broadcast %cst_9 : f32 to vector<16x128xf32>
    %12 = arith.maximumf %10, %11 : vector<16x128xf32>
    %13 = vector.extract_strided_slice %12 {offsets = [0, 0], sizes = [8, 128], strides = [1, 1]} : vector<16x128xf32> to vector<8x128xf32>
    %14 = vector.extract_strided_slice %12 {offsets = [8, 0], sizes = [8, 128], strides = [1, 1]} : vector<16x128xf32> to vector<8x128xf32>
    %15 = arith.maximumf %13, %14 : vector<8x128xf32>
    %c0_10 = arith.constant 0 : index
    %c0_11 = arith.constant 0 : index
    %16 = vector.load %arg3[%c0_10, %c0_11] : memref<8x128xf32, #tpu.memory_space<vmem>>, vector<8x128xf32>
    tpu.vector_store %arg3[%c0_10, %c0_11], %15 {strides = array<i32>} : memref<8x128xf32, #tpu.memory_space<vmem>>, vector<8x128xf32>,
    return
  }
}

</mosaic_0001>

<llo_original>
// kernel: model_forward.1
$region0: #{model_forward.1}
  #allocation0 [shape = 'u32[]', space=smem, size = 0x4, offset = 0x4, fixed_abs, tag = 'smem constant byte address 0x4 - core index']
  #allocation1 [shape = 'u32[72,128]{1,0:T(1,128)}', space=vmem, size = 0x9000, scoped, tag = 'internal scratch']
  %s0 = inlined_call_operand.vmem [shape: bf16[16,160], index: 0, kind: input, shape index: {}]
  %s1 = inlined_call_operand.vmem [shape: bf16[2,160,128], index: 1, kind: input, shape index: {}]
  %s2 = inlined_call_operand.vmem [shape: f32[16,1], index: 2, kind: input, shape index: {}]
  %s3 = inlined_call_operand.hbm [shape: f32[8,128], index: 3, kind: output, shape index: {}]
  %s4 = sld [smem:[#allocation0]]
  $region22: #{model_forward.1} parent=0
    _
  %s6 = ssub.s32 1, %s4
  %s7 = scalar_select 0, %s6, %s4
  $region1: #{model_forward.1} parent=0
    #allocation2 [shape = 'u8[4096]{0}', space=vmem, size = 0x1000, scoped, tag = 'output window, operand 0, single buffered']
    #allocation3 [shape = 's32[1]{0}', space=sflag, size = 0x4, scoped, tag = 'scoped memory for model_forward.1']
    %8 = vsyncpa [#allocation3], 0
    // Predicated region
    $region2: #{model_forward.1} parent=1 // pred_check
      _
    $region3: #{model_forward.1} parent=1 // pred_check_branch
      %10 = sbr.rel (0) target = $region5
    $region4: #{model_forward.1} parent=1 // pred_region
      _
    $region5: #{model_forward.1} parent=1 // pred_fallthru
      _
    // Predicated region
    $region6: #{model_forward.1} parent=1 // pred_check
      _
    $region7: #{model_forward.1} parent=1 // pred_check_branch
      %12 = sbr.rel (0) target = $region9
    $region8: #{model_forward.1} parent=1 // pred_region
      _
    $region9: #{model_forward.1} parent=1 // pred_fallthru
      _
    // Predicated region
    $region10: #{model_forward.1} parent=1 // pred_check
      _
    $region11: #{model_forward.1} parent=1 // pred_check_branch
      %14 = sbr.rel (0) target = $region13
    $region12: #{model_forward.1} parent=1 // pred_region
      _
    $region13: #{model_forward.1} parent=1 // pred_fallthru
      _
    %v16 = vld [vmem:[%s0] sm:$0xff]
    %v17 = vld [vmem:[%s0 + $0x8] sm:$0xff]
    %v18 = vld [vmem:[%s1] sm:$0xf]
    %v19 = vld [vmem:[%s1 + $0x4] sm:$0xf]
    %v20 = vld [vmem:[%s1 + $0x8] sm:$0xf]
    %v21 = vld [vmem:[%s1 + $0xc] sm:$0xf]
    %v22 = vld [vmem:[%s1 + $0x10] sm:$0xf]
    %v23 = vld [vmem:[%s1 + $0x14] sm:$0xf]
    %v24 = vld [vmem:[%s1 + $0x18] sm:$0xf]
    %v25 = vld [vmem:[%s1 + $0x1c] sm:$0xf]
    %v26 = vld [vmem:[%s1 + $0x20] sm:$0xf]
    %v27 = vld [vmem:[%s1 + $0x24] sm:$0xf]
    %v28 = vld [vmem:[%s1 + $0x28] sm:$0xf]
    %v29 = vld [vmem:[%s1 + $0x2c] sm:$0xf]
    %v30 = vld [vmem:[%s1 + $0x30] sm:$0xf]
    %v31 = vld [vmem:[%s1 + $0x34] sm:$0xf]
    %v32 = vld [vmem:[%s1 + $0x38] sm:$0xf]
    %v33 = vld [vmem:[%s1 + $0x3c] sm:$0xf]
    %v34 = vld [vmem:[%s1 + $0x40] sm:$0xf]
    %v35 = vld [vmem:[%s1 + $0x44] sm:$0xf]
    %v36 = vld [vmem:[%s1 + $0x48] sm:$0xf]
    %v37 = vld [vmem:[%s1 + $0x4c] sm:$0xf]
    %v40 = vunpack.c.l.b16 %v16
    %v41 = vunpack.c.h.b16 %v16
    %v42 = vunpack.c.l.b16 %v17
    %v43 = vunpack.c.h.b16 %v17
    %v44 = vpack.c.b16 %v42, %v40
    %v45 = vpack.c.b16 %v43, %v41
    %v67 = vunpack.c.l.b16 %v18
    %v68 = vunpack.c.l.b16 %v19
    %v69 = vunpack.c.l.b16 %v20
    %v70 = vunpack.c.l.b16 %v21
    %v71 = vunpack.c.l.b16 %v22
    %v72 = vunpack.c.l.b16 %v23
    %v73 = vunpack.c.l.b16 %v24
    %v74 = vunpack.c.l.b16 %v25
    %v75 = vunpack.c.l.b16 %v26
    %v76 = vunpack.c.l.b16 %v27
    %v77 = vunpack.c.l.b16 %v28
    %v78 = vunpack.c.l.b16 %v29
    %v79 = vunpack.c.l.b16 %v30
    %v80 = vunpack.c.l.b16 %v31
    %v81 = vunpack.c.l.b16 %v32
    %v82 = vunpack.c.l.b16 %v33
    %v83 = vunpack.c.l.b16 %v34
    %v84 = vunpack.c.l.b16 %v35
    %v85 = vunpack.c.l.b16 %v36
    %v86 = vunpack.c.l.b16 %v37
    %v87 = vpack.c.b16 %v68, %v67
    %v88 = vpack.c.b16 %v70, %v69
    %v89 = vpack.c.b16 %v72, %v71
    %v90 = vpack.c.b16 %v74, %v73
    %v91 = vpack.c.b16 %v76, %v75
    %v92 = vpack.c.b16 %v78, %v77
    %v93 = vpack.c.b16 %v80, %v79
    %v94 = vpack.c.b16 %v82, %v81
    %v95 = vpack.c.b16 %v84, %v83
    %v96 = vpack.c.b16 %v86, %v85
    %vm107 = vcmask 261120
    %v109 = vsel %vm107, %v45, 0
    %111 = vmatpush.bf16.msra.mxu0 %v94
    %112 = vmatpush.bf16.msra.mxu0 %v93
    %113 = vmatpush.bf16.msra.mxu0 %v92
    %114 = vmatpush.bf16.msra.mxu0 %v91
    %115 = vmatpush.bf16.msra.mxu0 %v90
    %116 = vmatpush.bf16.msra.mxu0 %v89
    %117 = vmatpush.bf16.msra.mxu0 %v88
    %118 = vmatpush.bf16.msra.mxu0 %v87
    %119 = vmatmul.bf16.gmra.mxu0 %v44
    %v120 = vpop.f32.mrf.mxu0
    %v121 = vadd.f32 0.0, %v120
    %v122 = vpop.f32.mrf.mxu0
    %v123 = vadd.f32 0.0, %v122
    %124 = vdwg.mxu0
    %125 = vmatpush.bf16.msra.mxu0 0
    %126 = vmatpush.bf16.msra.mxu0 0
    %127 = vmatpush.bf16.msra.mxu0 0
    %128 = vmatpush.bf16.msra.mxu0 0
    %129 = vmatpush.bf16.msra.mxu0 0
    %130 = vmatpush.bf16.msra.mxu0 0
    %131 = vmatpush.bf16.msra.mxu0 %v96
    %132 = vmatpush.bf16.msra.mxu0 %v95
    %133 = vmatmul.bf16.gmra.mxu0 %v109
    %v134 = vpop.f32.mrf.mxu0
    %v135 = vadd.f32 %v121, %v134
    %v136 = vpop.f32.mrf.mxu0
    %v137 = vadd.f32 %v123, %v136
    %138 = vdwg.mxu0
    %s139 = scalar_lea.vmem %s1, 80
    %v140 = vld [vmem:[%s139] sm:$0xf]
    %v141 = vld [vmem:[%s139 + $0x4] sm:$0xf]
    %v142 = vld [vmem:[%s139 + $0x8] sm:$0xf]
    %v143 = vld [vmem:[%s139 + $0xc] sm:$0xf]
    %v144 = vld [vmem:[%s139 + $0x10] sm:$0xf]
    %v145 = vld [vmem:[%s139 + $0x14] sm:$0xf]
    %v146 = vld [vmem:[%s139 + $0x18] sm:$0xf]
    %v147 = vld [vmem:[%s139 + $0x1c] sm:$0xf]
    %v148 = vld [vmem:[%s139 + $0x20] sm:$0xf]
    %v149 = vld [vmem:[%s139 + $0x24] sm:$0xf]
    %v150 = vld [vmem:[%s139 + $0x28] sm:$0xf]
    %v151 = vld [vmem:[%s139 + $0x2c] sm:$0xf]
    %v152 = vld [vmem:[%s139 + $0x30] sm:$0xf]
    %v153 = vld [vmem:[%s139 + $0x34] sm:$0xf]
    %v154 = vld [vmem:[%s139 + $0x38] sm:$0xf]
    %v155 = vld [vmem:[%s139 + $0x3c] sm:$0xf]
    %v156 = vld [vmem:[%s139 + $0x40] sm:$0xf]
    %v157 = vld [vmem:[%s139 + $0x44] sm:$0xf]
    %v158 = vld [vmem:[%s139 + $0x48] sm:$0xf]
    %v159 = vld [vmem:[%s139 + $0x4c] sm:$0xf]
    %v180 = vunpack.c.l.b16 %v140
    %v181 = vunpack.c.l.b16 %v141
    %v182 = vunpack.c.l.b16 %v142
    %v183 = vunpack.c.l.b16 %v143
    %v184 = vunpack.c.l.b16 %v144
    %v185 = vunpack.c.l.b16 %v145
    %v186 = vunpack.c.l.b16 %v146
    %v187 = vunpack.c.l.b16 %v147
    %v188 = vunpack.c.l.b16 %v148
    %v189 = vunpack.c.l.b16 %v149
    %v190 = vunpack.c.l.b16 %v150
    %v191 = vunpack.c.l.b16 %v151
    %v192 = vunpack.c.l.b16 %v152
    %v193 = vunpack.c.l.b16 %v153
    %v194 = vunpack.c.l.b16 %v154
    %v195 = vunpack.c.l.b16 %v155
    %v196 = vunpack.c.l.b16 %v156
    %v197 = vunpack.c.l.b16 %v157
    %v198 = vunpack.c.l.b16 %v158
    %v199 = vunpack.c.l.b16 %v159
    %v200 = vpack.c.b16 %v181, %v180
    %v201 = vpack.c.b16 %v183, %v182
    %v202 = vpack.c.b16 %v185, %v184
    %v203 = vpack.c.b16 %v187, %v186
    %v204 = vpack.c.b16 %v189, %v188
    %v205 = vpack.c.b16 %v191, %v190
    %v206 = vpack.c.b16 %v193, %v192
    %v207 = vpack.c.b16 %v195, %v194
    %v208 = vpack.c.b16 %v197, %v196
    %v209 = vpack.c.b16 %v199, %v198
    %220 = vmatpush.bf16.msra.mxu0 %v207
    %221 = vmatpush.bf16.msra.mxu0 %v206
    %222 = vmatpush.bf16.msra.mxu0 %v205
    %223 = vmatpush.bf16.msra.mxu0 %v204
    %224 = vmatpush.bf16.msra.mxu0 %v203
    %225 = vmatpush.bf16.msra.mxu0 %v202
    %226 = vmatpush.bf16.msra.mxu0 %v201
    %227 = vmatpush.bf16.msra.mxu0 %v200
    %228 = vmatmul.bf16.gmra.mxu0 %v44
    %v229 = vpop.f32.mrf.mxu0
    %v230 = vadd.f32 0.0, %v229
    %v231 = vpop.f32.mrf.mxu0
    %v232 = vadd.f32 0.0, %v231
    %233 = vdwg.mxu0
    %234 = vmatpush.bf16.msra.mxu0 0
    %235 = vmatpush.bf16.msra.mxu0 0
    %236 = vmatpush.bf16.msra.mxu0 0
    %237 = vmatpush.bf16.msra.mxu0 0
    %238 = vmatpush.bf16.msra.mxu0 0
    %239 = vmatpush.bf16.msra.mxu0 0
    %240 = vmatpush.bf16.msra.mxu0 %v209
    %241 = vmatpush.bf16.msra.mxu0 %v208
    %242 = vmatmul.bf16.gmra.mxu0 %v109
    %v243 = vpop.f32.mrf.mxu0
    %v244 = vadd.f32 %v230, %v243
    %v245 = vpop.f32.mrf.mxu0
    %v246 = vadd.f32 %v232, %v245
    %247 = vdwg.mxu0
    %v248 = vmax.f32 %v135, %v244
    %v249 = vmax.f32 %v137, %v246
    %v250 = vld [vmem:[%s2] sm:$0xff]
    %v251 = vld [vmem:[%s2 + $0x8] sm:$0xff]
    %253 = vset.pattern.permute.xlu0 0
    %254 = vperm.xlu0 %253, %v250
    %v255 = vpop.permute.xlu0 %254
    %258 = vset.pattern.permute.xlu0 0
    %259 = vperm.xlu0 %258, %v251
    %v260 = vpop.permute.xlu0 %259
    %v262 = vadd.f32 %v248, %v255
    %v263 = vadd.f32 %v249, %v260
    %v264 = vmax.f32 %v262, 0.0
    %v265 = vmax.f32 %v263, 0.0
    %v266 = vmax.f32 %v264, %v265
    %267 = vst [vmem:[#allocation2] sm:$0xff] %v266
    // Predicated region
    $region14: #{model_forward.1} parent=1 // pred_check
      _
    $region15: #{model_forward.1} parent=1 // pred_check_branch
      %269 = sbr.rel (0) target = $region17
    $region16: #{model_forward.1} parent=1 // pred_region
      %271 = vsyncadd [#allocation3], 0
      %s273 = sshll.u32 [#allocation2], 4
      %s274 = int_to_ptr.vmem [resolvable:$true] %s273
      %s275 = sshll.u32 %s3, 4
      %s276 = int_to_ptr.hbm [resolvable:$true] %s275
      %278 = dma.vmem_to_hbm [thread:$0]  %s274, 128, %s276, [#allocation3]
    $region17: #{model_forward.1} parent=1 // pred_fallthru
      _
    // Predicated region
    $region18: #{model_forward.1} parent=1 // pred_check
      _
    $region19: #{model_forward.1} parent=1 // pred_check_branch
      %280 = sbr.rel (0) target = $region21
    $region20: #{model_forward.1} parent=1 // pred_region
      %282 = dma.done [#allocation3], 128
    $region21: #{model_forward.1} parent=1 // pred_fallthru
      _
    %283 = vsyncpa [#allocation3], 1

</llo_original>
